<compile_context>
chip_gen: v6e
topology: v6e:2x2x1
jax: 0.10.0
libtpu: 0.0.40
codegen_flags: <defaults>
</compile_context>

<pallas_src>
import jax
import jax.numpy as jnp
from jax.experimental import pallas as pl
from jax.experimental.pallas import tpu as pltpu

# ----------------------------- model config ---------------------------------
HIDDEN_SIZE = 2
INPUT_SIZE = 5
NUM_CLASSES = 1
NUM_LAYERS = 1          # single-layer LSTM (as in the module)
FC1_SIZE = 128
LANE = 128              # lane-dense output width
GATES = 4 * HIDDEN_SIZE  # 8, gate order i, f, g, o

# Parameter-slab row layout (single (16, 128) f32 input).
ROW_WIH = 0                       # rows 0..4 : W_ih.T  (I, 4H) in cols [0:8]
ROW_BIAS = INPUT_SIZE             # row 5     : b_ih + b_hh     in cols [0:8]
ROW_WHH = INPUT_SIZE + 1          # rows 6..7 : W_hh.T  (H, 4H) in cols [0:8]
ROW_FC1W = 8                      # rows 8..9 : fc_1.weight.T (H, 128)
ROW_FC1B = 10                     # row 10    : fc_1.bias (128,)
ROW_FCW = 11                      # row 11    : fc.weight (128,)
ROW_FCB = 12                      # row 12    : fc.bias at [12, 0]
SLAB_ROWS = 16                    # padded to 2 full sublane groups


# ------------------------------- kernel -------------------------------------
def lstm1_kernel(x_ref, slab_ref, out_ref):
    B, T, I = x_ref.shape
    H = HIDDEN_SIZE
    G = GATES
    assert H == 2 and I == INPUT_SIZE, "kernel specialised for hidden=2, input=5"

    slab = slab_ref[...]                                 # (16, 128)
    xv = x_ref[...]                                      # (B, T, I)

    # ---- input projection, fused in-kernel (off the serial chain) ----------
    # gx[b, t, :] = x[b, t, :] @ W_ih.T + (b_ih + b_hh)   as 5 broadcast-FMAs.
    gx = jnp.broadcast_to(slab[ROW_BIAS, 0:G], (B, T, G))
    for i in range(I):                                   # static -> fully unrolled
        xi = jnp.broadcast_to(xv[:, :, i:i + 1], (B, T, G))
        wi = jnp.broadcast_to(slab[ROW_WIH + i, 0:G], (B, T, G))
        gx = gx + xi * wi                                # (B, T, G)

    # ---- recurrent weights, pre-broadcast ONCE (broadcasts are not CSE'd) ---
    whh0 = jnp.broadcast_to(slab[ROW_WHH + 0, 0:G], (B, G))   # W_hh[:, 0]
    whh1 = jnp.broadcast_to(slab[ROW_WHH + 1, 0:G], (B, G))   # W_hh[:, 1]

    h = jnp.zeros((B, H), jnp.float32)
    c = jnp.zeros((B, H), jnp.float32)

    # ---- fully unrolled T-step recurrence: pure VPU/EUP/XLU, no MXU ----------
    for t in range(T):                                   # T static -> static loads
        h0 = jnp.broadcast_to(h[:, 0:1], (B, G))
        h1 = jnp.broadcast_to(h[:, 1:2], (B, G))
        pre = gx[:, t, :] + h0 * whh0 + h1 * whh1        # (B, 4H): all gates at once
        sig = jax.nn.sigmoid(pre)                        # one EUP push for i,f,o
        tnh = jnp.tanh(pre)                              # one EUP push for g
        i_g = sig[:, 0:H]
        f_g = sig[:, H:2 * H]
        g_g = tnh[:, 2 * H:3 * H]
        o_g = sig[:, 3 * H:4 * H]
        c = f_g * c + i_g * g_g
        h = o_g * jnp.tanh(c)                            # h == hn.view(-1, H) after last step

    # ---- MLP head: relu -> fc_1 (K=2 broadcast-FMA) -> relu -> fc (reduce) ---
    hid = jnp.maximum(h, 0.0)                            # (B, H)
    w1r0 = jnp.broadcast_to(slab[ROW_FC1W + 0, :], (B, LANE))
    w1r1 = jnp.broadcast_to(slab[ROW_FC1W + 1, :], (B, LANE))
    b1 = jnp.broadcast_to(slab[ROW_FC1B, :], (B, LANE))
    z1 = (jnp.broadcast_to(hid[:, 0:1], (B, LANE)) * w1r0
          + jnp.broadcast_to(hid[:, 1:2], (B, LANE)) * w1r1 + b1)
    z1 = jnp.maximum(z1, 0.0)                            # (B, 128)
    w2 = jnp.broadcast_to(slab[ROW_FCW, :], (B, LANE))
    fcb = slab[ROW_FCB:ROW_FCB + 1, 0:1]                 # (1, 1)
    out = jnp.sum(z1 * w2, axis=-1, keepdims=True) + fcb  # (B, 1)

    # Lane-dense store (replicate across 128 lanes); wrapper slices [:, :1].
    out_ref[...] = jnp.broadcast_to(out, out_ref.shape).astype(out_ref.dtype)


# ------------------------------ wrappers --------------------------------------
def pack_params(params):
    """Pack all model parameters into one (16, 128) f32 slab (done once)."""
    slab = jnp.zeros((SLAB_ROWS, LANE), jnp.float32)
    slab = slab.at[ROW_WIH:ROW_WIH + INPUT_SIZE, 0:GATES].set(params["w_ih"].T)
    slab = slab.at[ROW_BIAS, 0:GATES].set(params["b_ih"] + params["b_hh"])
    slab = slab.at[ROW_WHH:ROW_WHH + HIDDEN_SIZE, 0:GATES].set(params["w_hh"].T)
    slab = slab.at[ROW_FC1W:ROW_FC1W + HIDDEN_SIZE, :].set(params["fc1_w"].T)
    slab = slab.at[ROW_FC1B, :].set(params["fc1_b"])
    slab = slab.at[ROW_FCW, :].set(params["fc_w"].reshape(-1))
    slab = slab.at[ROW_FCB, 0].set(params["fc_b"][0])
    return slab


@jax.jit
def lstm1_forward(x, slab):
    """x: (B, T, I) batch-first float32 (PyTorch convention) -> (B, 1)."""
    B = x.shape[0]
    vmem = pl.BlockSpec(memory_space=pltpu.MemorySpace.VMEM)
    out_padded = pl.pallas_call(
        lstm1_kernel,
        out_shape=jax.ShapeDtypeStruct((B, LANE), jnp.float32),
        in_specs=[vmem, vmem],        # tiny model: everything lives untiled in VMEM
        out_specs=vmem,
    )(x, slab)
    return out_padded[:, :NUM_CLASSES]


# --------------------------- pure-JAX reference -------------------------------
def lstm1_reference(x, params):
    """Straight re-implementation of the PyTorch module for validation."""
    B, T, _ = x.shape
    H = HIDDEN_SIZE
    b = params["b_ih"] + params["b_hh"]
    h = jnp.zeros((B, H), jnp.float32)
    c = jnp.zeros((B, H), jnp.float32)
    for t in range(T):
        g = x[:, t, :] @ params["w_ih"].T + h @ params["w_hh"].T + b
        i = jax.nn.sigmoid(g[:, 0:H])
        f = jax.nn.sigmoid(g[:, H:2 * H])
        gg = jnp.tanh(g[:, 2 * H:3 * H])
        o = jax.nn.sigmoid(g[:, 3 * H:4 * H])
        c = f * c + i * gg
        h = o * jnp.tanh(c)
    hid = jnp.maximum(h, 0.0)
    z1 = jnp.maximum(hid @ params["fc1_w"].T + params["fc1_b"], 0.0)
    return z1 @ params["fc_w"].T + params["fc_b"]


# --------------------------- param initialization ----------------------------
def init_params(key):
    """Deterministic init matching PyTorch parameter shapes (uniform +-1/sqrt(fan))."""
    ks = jax.random.split(key, 8)
    k_lstm = 1.0 / jnp.sqrt(HIDDEN_SIZE)
    k_fc1 = 1.0 / jnp.sqrt(HIDDEN_SIZE)
    k_fc = 1.0 / jnp.sqrt(FC1_SIZE)
    u = lambda k, shape, s: jax.random.uniform(k, shape, jnp.float32, -s, s)
    return {
        "w_ih": u(ks[0], (4 * HIDDEN_SIZE, INPUT_SIZE), k_lstm),   # nn.LSTM weight_ih_l0
        "w_hh": u(ks[1], (4 * HIDDEN_SIZE, HIDDEN_SIZE), k_lstm),  # nn.LSTM weight_hh_l0
        "b_ih": u(ks[2], (4 * HIDDEN_SIZE,), k_lstm),
        "b_hh": u(ks[3], (4 * HIDDEN_SIZE,), k_lstm),
        "fc1_w": u(ks[4], (FC1_SIZE, HIDDEN_SIZE), k_fc1),         # nn.Linear(hidden, 128)
        "fc1_b": u(ks[5], (FC1_SIZE,), k_fc1),
        "fc_w": u(ks[6], (NUM_CLASSES, FC1_SIZE), k_fc),           # nn.Linear(128, 1)
        "fc_b": u(ks[7], (NUM_CLASSES,), k_fc),
    }


# --------------------------------- main --------------------------------------
if __name__ == "__main__":
    key = jax.random.PRNGKey(0)
    k_x, k_p = jax.random.split(key)

    batch, seq_len = 2, 8
    x = jax.random.normal(k_x, (batch, seq_len, INPUT_SIZE), jnp.float32)
    params = init_params(k_p)
    slab = pack_params(params)          # one-time parameter packing (not per call)

    out = lstm1_forward(x, slab)
    jax.block_until_ready(out)
    assert out.shape == (batch, NUM_CLASSES)

    ref = lstm1_reference(x, params)
    assert jnp.allclose(out, ref, rtol=1e-5, atol=1e-5), (out, ref)
    print("KERNEL_OK")
</pallas_src>

<mosaic_0001>
module attributes {stable_mosaic.version = 11 : i64} {
  func.func @lstm1_kernel(%arg0: memref<2x8x5xf32, #tpu.memory_space<vmem>>, %arg1: memref<16x128xf32, #tpu.memory_space<vmem>>, %arg2: memref<2x128xf32, #tpu.memory_space<vmem>>) attributes {dimension_semantics = [], scalar_prefetch = 0 : i64, scratch_operands = 0 : i64, tpu.core_type = #tpu.core_type<tc>} {
    %c0 = arith.constant 0 : index
    %c0_0 = arith.constant 0 : index
    %0 = vector.load %arg1[%c0, %c0_0] : memref<16x128xf32, #tpu.memory_space<vmem>>, vector<16x128xf32>
    %c0_1 = arith.constant 0 : index
    %c0_2 = arith.constant 0 : index
    %c0_3 = arith.constant 0 : index
    %1 = vector.load %arg0[%c0_1, %c0_2, %c0_3] : memref<2x8x5xf32, #tpu.memory_space<vmem>>, vector<2x8x5xf32>
    %2 = vector.extract_strided_slice %0 {offsets = [5, 0], sizes = [1, 8], strides = [1, 1]} : vector<16x128xf32> to vector<1x8xf32>
    %3 = vector.shape_cast %2 : vector<1x8xf32> to vector<8xf32>
    %4 = vector.shape_cast %3 : vector<8xf32> to vector<1x1x8xf32>
    %5 = vector.broadcast %4 : vector<1x1x8xf32> to vector<2x8x8xf32>
    %6 = vector.extract_strided_slice %1 {offsets = [0, 0, 0], sizes = [2, 8, 1], strides = [1, 1, 1]} : vector<2x8x5xf32> to vector<2x8x1xf32>
    %7 = vector.shape_cast %6 : vector<2x8x1xf32> to vector<2x8x1xf32>
    %8 = vector.broadcast %7 : vector<2x8x1xf32> to vector<2x8x8xf32>
    %9 = vector.extract_strided_slice %0 {offsets = [0, 0], sizes = [1, 8], strides = [1, 1]} : vector<16x128xf32> to vector<1x8xf32>
    %10 = vector.shape_cast %9 : vector<1x8xf32> to vector<8xf32>
    %11 = vector.shape_cast %10 : vector<8xf32> to vector<1x1x8xf32>
    %12 = vector.broadcast %11 : vector<1x1x8xf32> to vector<2x8x8xf32>
    %13 = arith.mulf %8, %12 : vector<2x8x8xf32>
    %14 = arith.addf %5, %13 : vector<2x8x8xf32>
    %15 = vector.extract_strided_slice %1 {offsets = [0, 0, 1], sizes = [2, 8, 1], strides = [1, 1, 1]} : vector<2x8x5xf32> to vector<2x8x1xf32>
    %16 = vector.shape_cast %15 : vector<2x8x1xf32> to vector<2x8x1xf32>
    %17 = vector.broadcast %16 : vector<2x8x1xf32> to vector<2x8x8xf32>
    %18 = vector.extract_strided_slice %0 {offsets = [1, 0], sizes = [1, 8], strides = [1, 1]} : vector<16x128xf32> to vector<1x8xf32>
    %19 = vector.shape_cast %18 : vector<1x8xf32> to vector<8xf32>
    %20 = vector.shape_cast %19 : vector<8xf32> to vector<1x1x8xf32>
    %21 = vector.broadcast %20 : vector<1x1x8xf32> to vector<2x8x8xf32>
    %22 = arith.mulf %17, %21 : vector<2x8x8xf32>
    %23 = arith.addf %14, %22 : vector<2x8x8xf32>
    %24 = vector.extract_strided_slice %1 {offsets = [0, 0, 2], sizes = [2, 8, 1], strides = [1, 1, 1]} : vector<2x8x5xf32> to vector<2x8x1xf32>
    %25 = vector.shape_cast %24 : vector<2x8x1xf32> to vector<2x8x1xf32>
    %26 = vector.broadcast %25 : vector<2x8x1xf32> to vector<2x8x8xf32>
    %27 = vector.extract_strided_slice %0 {offsets = [2, 0], sizes = [1, 8], strides = [1, 1]} : vector<16x128xf32> to vector<1x8xf32>
    %28 = vector.shape_cast %27 : vector<1x8xf32> to vector<8xf32>
    %29 = vector.shape_cast %28 : vector<8xf32> to vector<1x1x8xf32>
    %30 = vector.broadcast %29 : vector<1x1x8xf32> to vector<2x8x8xf32>
    %31 = arith.mulf %26, %30 : vector<2x8x8xf32>
    %32 = arith.addf %23, %31 : vector<2x8x8xf32>
    %33 = vector.extract_strided_slice %1 {offsets = [0, 0, 3], sizes = [2, 8, 1], strides = [1, 1, 1]} : vector<2x8x5xf32> to vector<2x8x1xf32>
    %34 = vector.shape_cast %33 : vector<2x8x1xf32> to vector<2x8x1xf32>
    %35 = vector.broadcast %34 : vector<2x8x1xf32> to vector<2x8x8xf32>
    %36 = vector.extract_strided_slice %0 {offsets = [3, 0], sizes = [1, 8], strides = [1, 1]} : vector<16x128xf32> to vector<1x8xf32>
    %37 = vector.shape_cast %36 : vector<1x8xf32> to vector<8xf32>
    %38 = vector.shape_cast %37 : vector<8xf32> to vector<1x1x8xf32>
    %39 = vector.broadcast %38 : vector<1x1x8xf32> to vector<2x8x8xf32>
    %40 = arith.mulf %35, %39 : vector<2x8x8xf32>
    %41 = arith.addf %32, %40 : vector<2x8x8xf32>
    %42 = vector.extract_strided_slice %1 {offsets = [0, 0, 4], sizes = [2, 8, 1], strides = [1, 1, 1]} : vector<2x8x5xf32> to vector<2x8x1xf32>
    %43 = vector.shape_cast %42 : vector<2x8x1xf32> to vector<2x8x1xf32>
    %44 = vector.broadcast %43 : vector<2x8x1xf32> to vector<2x8x8xf32>
    %45 = vector.extract_strided_slice %0 {offsets = [4, 0], sizes = [1, 8], strides = [1, 1]} : vector<16x128xf32> to vector<1x8xf32>
    %46 = vector.shape_cast %45 : vector<1x8xf32> to vector<8xf32>
    %47 = vector.shape_cast %46 : vector<8xf32> to vector<1x1x8xf32>
    %48 = vector.broadcast %47 : vector<1x1x8xf32> to vector<2x8x8xf32>
    %49 = arith.mulf %44, %48 : vector<2x8x8xf32>
    %50 = arith.addf %41, %49 : vector<2x8x8xf32>
    %51 = vector.extract_strided_slice %0 {offsets = [6, 0], sizes = [1, 8], strides = [1, 1]} : vector<16x128xf32> to vector<1x8xf32>
    %52 = vector.shape_cast %51 : vector<1x8xf32> to vector<8xf32>
    %53 = vector.shape_cast %52 : vector<8xf32> to vector<1x8xf32>
    %54 = vector.broadcast %53 : vector<1x8xf32> to vector<2x8xf32>
    %55 = vector.extract_strided_slice %0 {offsets = [7, 0], sizes = [1, 8], strides = [1, 1]} : vector<16x128xf32> to vector<1x8xf32>
    %56 = vector.shape_cast %55 : vector<1x8xf32> to vector<8xf32>
    %57 = vector.shape_cast %56 : vector<8xf32> to vector<1x8xf32>
    %58 = vector.broadcast %57 : vector<1x8xf32> to vector<2x8xf32>
    %cst = arith.constant 0.000000e+00 : f32
    %59 = vector.broadcast %cst : f32 to vector<2x2xf32>
    %cst_4 = arith.constant 0.000000e+00 : f32
    %60 = vector.broadcast %cst_4 : f32 to vector<2x2xf32>
    %61 = vector.extract_strided_slice %59 {offsets = [0, 0], sizes = [2, 1], strides = [1, 1]} : vector<2x2xf32> to vector<2x1xf32>
    %62 = vector.shape_cast %61 : vector<2x1xf32> to vector<2x1xf32>
    %63 = vector.broadcast %62 : vector<2x1xf32> to vector<2x8xf32>
    %64 = vector.extract_strided_slice %59 {offsets = [0, 1], sizes = [2, 1], strides = [1, 1]} : vector<2x2xf32> to vector<2x1xf32>
    %65 = vector.shape_cast %64 : vector<2x1xf32> to vector<2x1xf32>
    %66 = vector.broadcast %65 : vector<2x1xf32> to vector<2x8xf32>
    %67 = vector.extract_strided_slice %50 {offsets = [0, 0, 0], sizes = [2, 1, 8], strides = [1, 1, 1]} : vector<2x8x8xf32> to vector<2x1x8xf32>
    %68 = vector.shape_cast %67 : vector<2x1x8xf32> to vector<2x8xf32>
    %69 = arith.mulf %63, %54 : vector<2x8xf32>
    %70 = arith.addf %68, %69 : vector<2x8xf32>
    %71 = arith.mulf %66, %58 : vector<2x8xf32>
    %72 = arith.addf %70, %71 : vector<2x8xf32>
    %73 = arith.negf %72 : vector<2x8xf32>
    %74 = math.exp %73 : vector<2x8xf32>
    %cst_5 = arith.constant 1.000000e+00 : f32
    %75 = vector.broadcast %cst_5 : f32 to vector<2x8xf32>
    %76 = arith.addf %75, %74 : vector<2x8xf32>
    %77 = arith.divf %75, %76 : vector<2x8xf32>
    %78 = math.tanh %72 : vector<2x8xf32>
    %79 = vector.extract_strided_slice %77 {offsets = [0, 0], sizes = [2, 2], strides = [1, 1]} : vector<2x8xf32> to vector<2x2xf32>
    %80 = vector.extract_strided_slice %77 {offsets = [0, 2], sizes = [2, 2], strides = [1, 1]} : vector<2x8xf32> to vector<2x2xf32>
    %81 = vector.extract_strided_slice %78 {offsets = [0, 4], sizes = [2, 2], strides = [1, 1]} : vector<2x8xf32> to vector<2x2xf32>
    %82 = vector.extract_strided_slice %77 {offsets = [0, 6], sizes = [2, 2], strides = [1, 1]} : vector<2x8xf32> to vector<2x2xf32>
    %83 = arith.mulf %80, %60 : vector<2x2xf32>
    %84 = arith.mulf %79, %81 : vector<2x2xf32>
    %85 = arith.addf %83, %84 : vector<2x2xf32>
    %86 = math.tanh %85 : vector<2x2xf32>
    %87 = arith.mulf %82, %86 : vector<2x2xf32>
    %88 = vector.extract_strided_slice %87 {offsets = [0, 0], sizes = [2, 1], strides = [1, 1]} : vector<2x2xf32> to vector<2x1xf32>
    %89 = vector.shape_cast %88 : vector<2x1xf32> to vector<2x1xf32>
    %90 = vector.broadcast %89 : vector<2x1xf32> to vector<2x8xf32>
    %91 = vector.extract_strided_slice %87 {offsets = [0, 1], sizes = [2, 1], strides = [1, 1]} : vector<2x2xf32> to vector<2x1xf32>
    %92 = vector.shape_cast %91 : vector<2x1xf32> to vector<2x1xf32>
    %93 = vector.broadcast %92 : vector<2x1xf32> to vector<2x8xf32>
    %94 = vector.extract_strided_slice %50 {offsets = [0, 1, 0], sizes = [2, 1, 8], strides = [1, 1, 1]} : vector<2x8x8xf32> to vector<2x1x8xf32>
    %95 = vector.shape_cast %94 : vector<2x1x8xf32> to vector<2x8xf32>
    %96 = arith.mulf %90, %54 : vector<2x8xf32>
    %97 = arith.addf %95, %96 : vector<2x8xf32>
    %98 = arith.mulf %93, %58 : vector<2x8xf32>
    %99 = arith.addf %97, %98 : vector<2x8xf32>
    %100 = arith.negf %99 : vector<2x8xf32>
    %101 = math.exp %100 : vector<2x8xf32>
    %cst_6 = arith.constant 1.000000e+00 : f32
    %102 = vector.broadcast %cst_6 : f32 to vector<2x8xf32>
    %103 = arith.addf %102, %101 : vector<2x8xf32>
    %104 = arith.divf %102, %103 : vector<2x8xf32>
    %105 = math.tanh %99 : vector<2x8xf32>
    %106 = vector.extract_strided_slice %104 {offsets = [0, 0], sizes = [2, 2], strides = [1, 1]} : vector<2x8xf32> to vector<2x2xf32>
    %107 = vector.extract_strided_slice %104 {offsets = [0, 2], sizes = [2, 2], strides = [1, 1]} : vector<2x8xf32> to vector<2x2xf32>
    %108 = vector.extract_strided_slice %105 {offsets = [0, 4], sizes = [2, 2], strides = [1, 1]} : vector<2x8xf32> to vector<2x2xf32>
    %109 = vector.extract_strided_slice %104 {offsets = [0, 6], sizes = [2, 2], strides = [1, 1]} : vector<2x8xf32> to vector<2x2xf32>
    %110 = arith.mulf %107, %85 : vector<2x2xf32>
    %111 = arith.mulf %106, %108 : vector<2x2xf32>
    %112 = arith.addf %110, %111 : vector<2x2xf32>
    %113 = math.tanh %112 : vector<2x2xf32>
    %114 = arith.mulf %109, %113 : vector<2x2xf32>
    %115 = vector.extract_strided_slice %114 {offsets = [0, 0], sizes = [2, 1], strides = [1, 1]} : vector<2x2xf32> to vector<2x1xf32>
    %116 = vector.shape_cast %115 : vector<2x1xf32> to vector<2x1xf32>
    %117 = vector.broadcast %116 : vector<2x1xf32> to vector<2x8xf32>
    %118 = vector.extract_strided_slice %114 {offsets = [0, 1], sizes = [2, 1], strides = [1, 1]} : vector<2x2xf32> to vector<2x1xf32>
    %119 = vector.shape_cast %118 : vector<2x1xf32> to vector<2x1xf32>
    %120 = vector.broadcast %119 : vector<2x1xf32> to vector<2x8xf32>
    %121 = vector.extract_strided_slice %50 {offsets = [0, 2, 0], sizes = [2, 1, 8], strides = [1, 1, 1]} : vector<2x8x8xf32> to vector<2x1x8xf32>
    %122 = vector.shape_cast %121 : vector<2x1x8xf32> to vector<2x8xf32>
    %123 = arith.mulf %117, %54 : vector<2x8xf32>
    %124 = arith.addf %122, %123 : vector<2x8xf32>
    %125 = arith.mulf %120, %58 : vector<2x8xf32>
    %126 = arith.addf %124, %125 : vector<2x8xf32>
    %127 = arith.negf %126 : vector<2x8xf32>
    %128 = math.exp %127 : vector<2x8xf32>
    %cst_7 = arith.constant 1.000000e+00 : f32
    %129 = vector.broadcast %cst_7 : f32 to vector<2x8xf32>
    %130 = arith.addf %129, %128 : vector<2x8xf32>
    %131 = arith.divf %129, %130 : vector<2x8xf32>
    %132 = math.tanh %126 : vector<2x8xf32>
    %133 = vector.extract_strided_slice %131 {offsets = [0, 0], sizes = [2, 2], strides = [1, 1]} : vector<2x8xf32> to vector<2x2xf32>
    %134 = vector.extract_strided_slice %131 {offsets = [0, 2], sizes = [2, 2], strides = [1, 1]} : vector<2x8xf32> to vector<2x2xf32>
    %135 = vector.extract_strided_slice %132 {offsets = [0, 4], sizes = [2, 2], strides = [1, 1]} : vector<2x8xf32> to vector<2x2xf32>
    %136 = vector.extract_strided_slice %131 {offsets = [0, 6], sizes = [2, 2], strides = [1, 1]} : vector<2x8xf32> to vector<2x2xf32>
    %137 = arith.mulf %134, %112 : vector<2x2xf32>
    %138 = arith.mulf %133, %135 : vector<2x2xf32>
    %139 = arith.addf %137, %138 : vector<2x2xf32>
    %140 = math.tanh %139 : vector<2x2xf32>
    %141 = arith.mulf %136, %140 : vector<2x2xf32>
    %142 = vector.extract_strided_slice %141 {offsets = [0, 0], sizes = [2, 1], strides = [1, 1]} : vector<2x2xf32> to vector<2x1xf32>
    %143 = vector.shape_cast %142 : vector<2x1xf32> to vector<2x1xf32>
    %144 = vector.broadcast %143 : vector<2x1xf32> to vector<2x8xf32>
    %145 = vector.extract_strided_slice %141 {offsets = [0, 1], sizes = [2, 1], strides = [1, 1]} : vector<2x2xf32> to vector<2x1xf32>
    %146 = vector.shape_cast %145 : vector<2x1xf32> to vector<2x1xf32>
    %147 = vector.broadcast %146 : vector<2x1xf32> to vector<2x8xf32>
    %148 = vector.extract_strided_slice %50 {offsets = [0, 3, 0], sizes = [2, 1, 8], strides = [1, 1, 1]} : vector<2x8x8xf32> to vector<2x1x8xf32>
    %149 = vector.shape_cast %148 : vector<2x1x8xf32> to vector<2x8xf32>
    %150 = arith.mulf %144, %54 : vector<2x8xf32>
    %151 = arith.addf %149, %150 : vector<2x8xf32>
    %152 = arith.mulf %147, %58 : vector<2x8xf32>
    %153 = arith.addf %151, %152 : vector<2x8xf32>
    %154 = arith.negf %153 : vector<2x8xf32>
    %155 = math.exp %154 : vector<2x8xf32>
    %cst_8 = arith.constant 1.000000e+00 : f32
    %156 = vector.broadcast %cst_8 : f32 to vector<2x8xf32>
    %157 = arith.addf %156, %155 : vector<2x8xf32>
    %158 = arith.divf %156, %157 : vector<2x8xf32>
    %159 = math.tanh %153 : vector<2x8xf32>
    %160 = vector.extract_strided_slice %158 {offsets = [0, 0], sizes = [2, 2], strides = [1, 1]} : vector<2x8xf32> to vector<2x2xf32>
    %161 = vector.extract_strided_slice %158 {offsets = [0, 2], sizes = [2, 2], strides = [1, 1]} : vector<2x8xf32> to vector<2x2xf32>
    %162 = vector.extract_strided_slice %159 {offsets = [0, 4], sizes = [2, 2], strides = [1, 1]} : vector<2x8xf32> to vector<2x2xf32>
    %163 = vector.extract_strided_slice %158 {offsets = [0, 6], sizes = [2, 2], strides = [1, 1]} : vector<2x8xf32> to vector<2x2xf32>
    %164 = arith.mulf %161, %139 : vector<2x2xf32>
    %165 = arith.mulf %160, %162 : vector<2x2xf32>
    %166 = arith.addf %164, %165 : vector<2x2xf32>
    %167 = math.tanh %166 : vector<2x2xf32>
    %168 = arith.mulf %163, %167 : vector<2x2xf32>
    %169 = vector.extract_strided_slice %168 {offsets = [0, 0], sizes = [2, 1], strides = [1, 1]} : vector<2x2xf32> to vector<2x1xf32>
    %170 = vector.shape_cast %169 : vector<2x1xf32> to vector<2x1xf32>
    %171 = vector.broadcast %170 : vector<2x1xf32> to vector<2x8xf32>
    %172 = vector.extract_strided_slice %168 {offsets = [0, 1], sizes = [2, 1], strides = [1, 1]} : vector<2x2xf32> to vector<2x1xf32>
    %173 = vector.shape_cast %172 : vector<2x1xf32> to vector<2x1xf32>
    %174 = vector.broadcast %173 : vector<2x1xf32> to vector<2x8xf32>
    %175 = vector.extract_strided_slice %50 {offsets = [0, 4, 0], sizes = [2, 1, 8], strides = [1, 1, 1]} : vector<2x8x8xf32> to vector<2x1x8xf32>
    %176 = vector.shape_cast %175 : vector<2x1x8xf32> to vector<2x8xf32>
    %177 = arith.mulf %171, %54 : vector<2x8xf32>
    %178 = arith.addf %176, %177 : vector<2x8xf32>
    %179 = arith.mulf %174, %58 : vector<2x8xf32>
    %180 = arith.addf %178, %179 : vector<2x8xf32>
    %181 = arith.negf %180 : vector<2x8xf32>
    %182 = math.exp %181 : vector<2x8xf32>
    %cst_9 = arith.constant 1.000000e+00 : f32
    %183 = vector.broadcast %cst_9 : f32 to vector<2x8xf32>
    %184 = arith.addf %183, %182 : vector<2x8xf32>
    %185 = arith.divf %183, %184 : vector<2x8xf32>
    %186 = math.tanh %180 : vector<2x8xf32>
    %187 = vector.extract_strided_slice %185 {offsets = [0, 0], sizes = [2, 2], strides = [1, 1]} : vector<2x8xf32> to vector<2x2xf32>
    %188 = vector.extract_strided_slice %185 {offsets = [0, 2], sizes = [2, 2], strides = [1, 1]} : vector<2x8xf32> to vector<2x2xf32>
    %189 = vector.extract_strided_slice %186 {offsets = [0, 4], sizes = [2, 2], strides = [1, 1]} : vector<2x8xf32> to vector<2x2xf32>
    %190 = vector.extract_strided_slice %185 {offsets = [0, 6], sizes = [2, 2], strides = [1, 1]} : vector<2x8xf32> to vector<2x2xf32>
    %191 = arith.mulf %188, %166 : vector<2x2xf32>
    %192 = arith.mulf %187, %189 : vector<2x2xf32>
    %193 = arith.addf %191, %192 : vector<2x2xf32>
    %194 = math.tanh %193 : vector<2x2xf32>
    %195 = arith.mulf %190, %194 : vector<2x2xf32>
    %196 = vector.extract_strided_slice %195 {offsets = [0, 0], sizes = [2, 1], strides = [1, 1]} : vector<2x2xf32> to vector<2x1xf32>
    %197 = vector.shape_cast %196 : vector<2x1xf32> to vector<2x1xf32>
    %198 = vector.broadcast %197 : vector<2x1xf32> to vector<2x8xf32>
    %199 = vector.extract_strided_slice %195 {offsets = [0, 1], sizes = [2, 1], strides = [1, 1]} : vector<2x2xf32> to vector<2x1xf32>
    %200 = vector.shape_cast %199 : vector<2x1xf32> to vector<2x1xf32>
    %201 = vector.broadcast %200 : vector<2x1xf32> to vector<2x8xf32>
    %202 = vector.extract_strided_slice %50 {offsets = [0, 5, 0], sizes = [2, 1, 8], strides = [1, 1, 1]} : vector<2x8x8xf32> to vector<2x1x8xf32>
    %203 = vector.shape_cast %202 : vector<2x1x8xf32> to vector<2x8xf32>
    %204 = arith.mulf %198, %54 : vector<2x8xf32>
    %205 = arith.addf %203, %204 : vector<2x8xf32>
    %206 = arith.mulf %201, %58 : vector<2x8xf32>
    %207 = arith.addf %205, %206 : vector<2x8xf32>
    %208 = arith.negf %207 : vector<2x8xf32>
    %209 = math.exp %208 : vector<2x8xf32>
    %cst_10 = arith.constant 1.000000e+00 : f32
    %210 = vector.broadcast %cst_10 : f32 to vector<2x8xf32>
    %211 = arith.addf %210, %209 : vector<2x8xf32>
    %212 = arith.divf %210, %211 : vector<2x8xf32>
    %213 = math.tanh %207 : vector<2x8xf32>
    %214 = vector.extract_strided_slice %212 {offsets = [0, 0], sizes = [2, 2], strides = [1, 1]} : vector<2x8xf32> to vector<2x2xf32>
    %215 = vector.extract_strided_slice %212 {offsets = [0, 2], sizes = [2, 2], strides = [1, 1]} : vector<2x8xf32> to vector<2x2xf32>
    %216 = vector.extract_strided_slice %213 {offsets = [0, 4], sizes = [2, 2], strides = [1, 1]} : vector<2x8xf32> to vector<2x2xf32>
    %217 = vector.extract_strided_slice %212 {offsets = [0, 6], sizes = [2, 2], strides = [1, 1]} : vector<2x8xf32> to vector<2x2xf32>
    %218 = arith.mulf %215, %193 : vector<2x2xf32>
    %219 = arith.mulf %214, %216 : vector<2x2xf32>
    %220 = arith.addf %218, %219 : vector<2x2xf32>
    %221 = math.tanh %220 : vector<2x2xf32>
    %222 = arith.mulf %217, %221 : vector<2x2xf32>
    %223 = vector.extract_strided_slice %222 {offsets = [0, 0], sizes = [2, 1], strides = [1, 1]} : vector<2x2xf32> to vector<2x1xf32>
    %224 = vector.shape_cast %223 : vector<2x1xf32> to vector<2x1xf32>
    %225 = vector.broadcast %224 : vector<2x1xf32> to vector<2x8xf32>
    %226 = vector.extract_strided_slice %222 {offsets = [0, 1], sizes = [2, 1], strides = [1, 1]} : vector<2x2xf32> to vector<2x1xf32>
    %227 = vector.shape_cast %226 : vector<2x1xf32> to vector<2x1xf32>
    %228 = vector.broadcast %227 : vector<2x1xf32> to vector<2x8xf32>
    %229 = vector.extract_strided_slice %50 {offsets = [0, 6, 0], sizes = [2, 1, 8], strides = [1, 1, 1]} : vector<2x8x8xf32> to vector<2x1x8xf32>
    %230 = vector.shape_cast %229 : vector<2x1x8xf32> to vector<2x8xf32>
    %231 = arith.mulf %225, %54 : vector<2x8xf32>
    %232 = arith.addf %230, %231 : vector<2x8xf32>
    %233 = arith.mulf %228, %58 : vector<2x8xf32>
    %234 = arith.addf %232, %233 : vector<2x8xf32>
    %235 = arith.negf %234 : vector<2x8xf32>
    %236 = math.exp %235 : vector<2x8xf32>
    %cst_11 = arith.constant 1.000000e+00 : f32
    %237 = vector.broadcast %cst_11 : f32 to vector<2x8xf32>
    %238 = arith.addf %237, %236 : vector<2x8xf32>
    %239 = arith.divf %237, %238 : vector<2x8xf32>
    %240 = math.tanh %234 : vector<2x8xf32>
    %241 = vector.extract_strided_slice %239 {offsets = [0, 0], sizes = [2, 2], strides = [1, 1]} : vector<2x8xf32> to vector<2x2xf32>
    %242 = vector.extract_strided_slice %239 {offsets = [0, 2], sizes = [2, 2], strides = [1, 1]} : vector<2x8xf32> to vector<2x2xf32>
    %243 = vector.extract_strided_slice %240 {offsets = [0, 4], sizes = [2, 2], strides = [1, 1]} : vector<2x8xf32> to vector<2x2xf32>
    %244 = vector.extract_strided_slice %239 {offsets = [0, 6], sizes = [2, 2], strides = [1, 1]} : vector<2x8xf32> to vector<2x2xf32>
    %245 = arith.mulf %242, %220 : vector<2x2xf32>
    %246 = arith.mulf %241, %243 : vector<2x2xf32>
    %247 = arith.addf %245, %246 : vector<2x2xf32>
    %248 = math.tanh %247 : vector<2x2xf32>
    %249 = arith.mulf %244, %248 : vector<2x2xf32>
    %250 = vector.extract_strided_slice %249 {offsets = [0, 0], sizes = [2, 1], strides = [1, 1]} : vector<2x2xf32> to vector<2x1xf32>
    %251 = vector.shape_cast %250 : vector<2x1xf32> to vector<2x1xf32>
    %252 = vector.broadcast %251 : vector<2x1xf32> to vector<2x8xf32>
    %253 = vector.extract_strided_slice %249 {offsets = [0, 1], sizes = [2, 1], strides = [1, 1]} : vector<2x2xf32> to vector<2x1xf32>
    %254 = vector.shape_cast %253 : vector<2x1xf32> to vector<2x1xf32>
    %255 = vector.broadcast %254 : vector<2x1xf32> to vector<2x8xf32>
    %256 = vector.extract_strided_slice %50 {offsets = [0, 7, 0], sizes = [2, 1, 8], strides = [1, 1, 1]} : vector<2x8x8xf32> to vector<2x1x8xf32>
    %257 = vector.shape_cast %256 : vector<2x1x8xf32> to vector<2x8xf32>
    %258 = arith.mulf %252, %54 : vector<2x8xf32>
    %259 = arith.addf %257, %258 : vector<2x8xf32>
    %260 = arith.mulf %255, %58 : vector<2x8xf32>
    %261 = arith.addf %259, %260 : vector<2x8xf32>
    %262 = arith.negf %261 : vector<2x8xf32>
    %263 = math.exp %262 : vector<2x8xf32>
    %cst_12 = arith.constant 1.000000e+00 : f32
    %264 = vector.broadcast %cst_12 : f32 to vector<2x8xf32>
    %265 = arith.addf %264, %263 : vector<2x8xf32>
    %266 = arith.divf %264, %265 : vector<2x8xf32>
    %267 = math.tanh %261 : vector<2x8xf32>
    %268 = vector.extract_strided_slice %266 {offsets = [0, 0], sizes = [2, 2], strides = [1, 1]} : vector<2x8xf32> to vector<2x2xf32>
    %269 = vector.extract_strided_slice %266 {offsets = [0, 2], sizes = [2, 2], strides = [1, 1]} : vector<2x8xf32> to vector<2x2xf32>
    %270 = vector.extract_strided_slice %267 {offsets = [0, 4], sizes = [2, 2], strides = [1, 1]} : vector<2x8xf32> to vector<2x2xf32>
    %271 = vector.extract_strided_slice %266 {offsets = [0, 6], sizes = [2, 2], strides = [1, 1]} : vector<2x8xf32> to vector<2x2xf32>
    %272 = arith.mulf %269, %247 : vector<2x2xf32>
    %273 = arith.mulf %268, %270 : vector<2x2xf32>
    %274 = arith.addf %272, %273 : vector<2x2xf32>
    %275 = math.tanh %274 : vector<2x2xf32>
    %276 = arith.mulf %271, %275 : vector<2x2xf32>
    %cst_13 = arith.constant 0.000000e+00 : f32
    %277 = vector.broadcast %cst_13 : f32 to vector<2x2xf32>
    %278 = arith.maximumf %276, %277 : vector<2x2xf32>
    %279 = vector.extract_strided_slice %0 {offsets = [8, 0], sizes = [1, 128], strides = [1, 1]} : vector<16x128xf32> to vector<1x128xf32>
    %280 = vector.shape_cast %279 : vector<1x128xf32> to vector<128xf32>
    %281 = vector.shape_cast %280 : vector<128xf32> to vector<1x128xf32>
    %282 = vector.broadcast %281 : vector<1x128xf32> to vector<2x128xf32>
    %283 = vector.extract_strided_slice %0 {offsets = [9, 0], sizes = [1, 128], strides = [1, 1]} : vector<16x128xf32> to vector<1x128xf32>
    %284 = vector.shape_cast %283 : vector<1x128xf32> to vector<128xf32>
    %285 = vector.shape_cast %284 : vector<128xf32> to vector<1x128xf32>
    %286 = vector.broadcast %285 : vector<1x128xf32> to vector<2x128xf32>
    %287 = vector.extract_strided_slice %0 {offsets = [10, 0], sizes = [1, 128], strides = [1, 1]} : vector<16x128xf32> to vector<1x128xf32>
    %288 = vector.shape_cast %287 : vector<1x128xf32> to vector<128xf32>
    %289 = vector.shape_cast %288 : vector<128xf32> to vector<1x128xf32>
    %290 = vector.broadcast %289 : vector<1x128xf32> to vector<2x128xf32>
    %291 = vector.extract_strided_slice %278 {offsets = [0, 0], sizes = [2, 1], strides = [1, 1]} : vector<2x2xf32> to vector<2x1xf32>
    %292 = vector.shape_cast %291 : vector<2x1xf32> to vector<2x1xf32>
    %293 = vector.broadcast %292 : vector<2x1xf32> to vector<2x128xf32>
    %294 = arith.mulf %293, %282 : vector<2x128xf32>
    %295 = vector.extract_strided_slice %278 {offsets = [0, 1], sizes = [2, 1], strides = [1, 1]} : vector<2x2xf32> to vector<2x1xf32>
    %296 = vector.shape_cast %295 : vector<2x1xf32> to vector<2x1xf32>
    %297 = vector.broadcast %296 : vector<2x1xf32> to vector<2x128xf32>
    %298 = arith.mulf %297, %286 : vector<2x128xf32>
    %299 = arith.addf %294, %298 : vector<2x128xf32>
    %300 = arith.addf %299, %290 : vector<2x128xf32>
    %cst_14 = arith.constant 0.000000e+00 : f32
    %301 = vector.broadcast %cst_14 : f32 to vector<2x128xf32>
    %302 = arith.maximumf %300, %301 : vector<2x128xf32>
    %303 = vector.extract_strided_slice %0 {offsets = [11, 0], sizes = [1, 128], strides = [1, 1]} : vector<16x128xf32> to vector<1x128xf32>
    %304 = vector.shape_cast %303 : vector<1x128xf32> to vector<128xf32>
    %305 = vector.shape_cast %304 : vector<128xf32> to vector<1x128xf32>
    %306 = vector.broadcast %305 : vector<1x128xf32> to vector<2x128xf32>
    %307 = vector.extract_strided_slice %0 {offsets = [12, 0], sizes = [1, 1], strides = [1, 1]} : vector<16x128xf32> to vector<1x1xf32>
    %308 = arith.mulf %302, %306 : vector<2x128xf32>
    %cst_15 = arith.constant dense<0.000000e+00> : vector<2xf32>
    %309 = vector.multi_reduction <add>, %308, %cst_15 [1] : vector<2x128xf32> to vector<2xf32>
    %310 = vector.shape_cast %309 : vector<2xf32> to vector<2x1xf32>
    %311 = vector.broadcast %307 : vector<1x1xf32> to vector<2x1xf32>
    %312 = arith.addf %310, %311 : vector<2x1xf32>
    %313 = vector.shape_cast %312 : vector<2x1xf32> to vector<2x1xf32>
    %314 = vector.broadcast %313 : vector<2x1xf32> to vector<2x128xf32>
    %c0_16 = arith.constant 0 : index
    %c0_17 = arith.constant 0 : index
    %315 = vector.load %arg2[%c0_16, %c0_17] : memref<2x128xf32, #tpu.memory_space<vmem>>, vector<2x128xf32>
    tpu.vector_store %arg2[%c0_16, %c0_17], %314 {strides = array<i32>} : memref<2x128xf32, #tpu.memory_space<vmem>>, vector<2x128xf32>,
    return
  }
}

</mosaic_0001>

<llo_original>
// kernel: lstm1_forward.1
$region0: #{lstm1_forward.1}
  #allocation0 [shape = 'u32[]', space=smem, size = 0x4, offset = 0x4, fixed_abs, tag = 'smem constant byte address 0x4 - core index']
  #allocation1 [shape = 'u32[144,128]{1,0:T(1,128)}', space=vmem, size = 0x12000, scoped, tag = 'internal scratch']
  %s0 = inlined_call_operand.vmem [shape: f32[2,8,5], index: 0, kind: input, shape index: {}]
  %s1 = inlined_call_operand.vmem [shape: f32[16,128], index: 1, kind: input, shape index: {}]
  %s2 = inlined_call_operand.vmem [shape: f32[2,128], index: 2, kind: output, shape index: {}]
  %s3 = sld [smem:[#allocation0]]
  $region18: #{lstm1_forward.1} parent=0
    _
  %s5 = ssub.s32 1, %s3
  %s6 = scalar_select 0, %s5, %s3
  // Predicated region
  $region2: #{lstm1_forward.1} parent=0 // pred_check
    _
  $region3: #{lstm1_forward.1} parent=0 // pred_check_branch
    %8 = sbr.rel (0) target = $region5
  $region4: #{lstm1_forward.1} parent=0 // pred_region
    _
  $region5: #{lstm1_forward.1} parent=0 // pred_fallthru
    _
  // Predicated region
  $region6: #{lstm1_forward.1} parent=0 // pred_check
    _
  $region7: #{lstm1_forward.1} parent=0 // pred_check_branch
    %10 = sbr.rel (0) target = $region9
  $region8: #{lstm1_forward.1} parent=0 // pred_region
    _
  $region9: #{lstm1_forward.1} parent=0 // pred_fallthru
    _
  %v11 = vld [vmem:[%s1] sm:$0xff]
  %v12 = vld [vmem:[%s1 + $0x8] sm:$0xff]
  %v13 = vld [vmem:[%s0] sm:$0xff]
  %v14 = vld [vmem:[%s0 + $0x8] sm:$0xff]
  %v15 = vlaneseq
  %v16 = vshrl.u32 %v15, 7
  %v17 = vsub.s32 5, %v16
  %v18 = vrot.slane %v11, %v17
  %20 = vset.pattern.permute.xlu0 0
  %21 = vperm.xlu0 %20, %v13
  %v22 = vpop.permute.xlu0 %21
  %25 = vset.pattern.permute.xlu0 0
  %26 = vperm.xlu0 %25, %v14
  %v27 = vpop.permute.xlu0 %26
  %v29 = vlaneseq
  %v30 = vshrl.u32 %v29, 7
  %v31 = vsub.s32 0, %v30
  %v32 = vrot.slane %v11, %v31
  %v33 = vmul.f32 %v22, %v32
  %v34 = vmul.f32 %v27, %v32
  %v35 = vadd.f32 %v18, %v33
  %v36 = vadd.f32 %v18, %v34
  %37 = vset.pattern.permute.xlu0 1
  %38 = vperm.xlu0 %37, %v13
  %v39 = vpop.permute.xlu0 %38
  %41 = vset.pattern.permute.xlu0 1
  %42 = vperm.xlu0 %41, %v14
  %v43 = vpop.permute.xlu0 %42
  %v45 = vlaneseq
  %v46 = vshrl.u32 %v45, 7
  %v47 = vsub.s32 1, %v46
  %v48 = vrot.slane %v11, %v47
  %v49 = vmul.f32 %v39, %v48
  %v50 = vmul.f32 %v43, %v48
  %v51 = vadd.f32 %v35, %v49
  %v52 = vadd.f32 %v36, %v50
  %53 = vset.pattern.permute.xlu0 2
  %54 = vperm.xlu0 %53, %v13
  %v55 = vpop.permute.xlu0 %54
  %57 = vset.pattern.permute.xlu0 2
  %58 = vperm.xlu0 %57, %v14
  %v59 = vpop.permute.xlu0 %58
  %v61 = vlaneseq
  %v62 = vshrl.u32 %v61, 7
  %v63 = vsub.s32 2, %v62
  %v64 = vrot.slane %v11, %v63
  %v65 = vmul.f32 %v55, %v64
  %v66 = vmul.f32 %v59, %v64
  %v67 = vadd.f32 %v51, %v65
  %v68 = vadd.f32 %v52, %v66
  %69 = vset.pattern.permute.xlu0 3
  %70 = vperm.xlu0 %69, %v13
  %v71 = vpop.permute.xlu0 %70
  %73 = vset.pattern.permute.xlu0 3
  %74 = vperm.xlu0 %73, %v14
  %v75 = vpop.permute.xlu0 %74
  %v77 = vlaneseq
  %v78 = vshrl.u32 %v77, 7
  %v79 = vsub.s32 3, %v78
  %v80 = vrot.slane %v11, %v79
  %v81 = vmul.f32 %v71, %v80
  %v82 = vmul.f32 %v75, %v80
  %v83 = vadd.f32 %v67, %v81
  %v84 = vadd.f32 %v68, %v82
  %85 = vset.pattern.permute.xlu0 4
  %86 = vperm.xlu0 %85, %v13
  %v87 = vpop.permute.xlu0 %86
  %89 = vset.pattern.permute.xlu0 4
  %90 = vperm.xlu0 %89, %v14
  %v91 = vpop.permute.xlu0 %90
  %v93 = vlaneseq
  %v94 = vshrl.u32 %v93, 7
  %v95 = vsub.s32 4, %v94
  %v96 = vrot.slane %v11, %v95
  %v97 = vmul.f32 %v87, %v96
  %v98 = vmul.f32 %v91, %v96
  %v99 = vadd.f32 %v83, %v97
  %v100 = vadd.f32 %v84, %v98
  %v101 = vlaneseq
  %v102 = vshrl.u32 %v101, 7
  %v103 = vsub.s32 6, %v102
  %v104 = vrot.slane %v11, %v103
  %v105 = vlaneseq
  %v106 = vshrl.u32 %v105, 7
  %v107 = vsub.s32 7, %v106
  %v108 = vrot.slane %v11, %v107
  %v109 = vmul.f32 %v104, 0.0
  %v110 = vadd.f32 %v99, %v109
  %v111 = vadd.f32 %v100, %v109
  %v112 = vmul.f32 %v108, 0.0
  %v113 = vadd.f32 %v110, %v112
  %v114 = vadd.f32 %v111, %v112
  %v115 = vxor.u32 %v113, 2147483648
  %v116 = vxor.u32 %v114, 2147483648
  %v117 = vmul.f32 %v115, 1.442695
  %v118 = vpow.pop %v117
  %v119 = vmul.f32 %v116, 1.442695
  %v120 = vpow.pop %v119
  %v121 = vadd.f32 %v118, 1.0
  %v122 = vadd.f32 %v120, 1.0
  %v123 = vrcp.pop %v121
  %v124 = vmul.f32 1.0, %v123
  %v125 = vrcp.pop %v122
  %v126 = vmul.f32 1.0, %v125
  %v127 = vtanh.pop %v113
  %v128 = vtanh.pop %v114
  %v129 = vmul.f32 %v124, 0.0
  %v130 = vmul.f32 %v126, 0.0
  %133 = vrot.lane.b32.xlu0 %v127, 124
  %v134 = vpop.permute.xlu0 %133
  %135 = vrot.lane.b32.xlu0 %v128, 124
  %v136 = vpop.permute.xlu0 %135
  %v139 = vmul.f32 %v124, %v134
  %v140 = vmul.f32 %v126, %v136
  %143 = vrot.lane.b32.xlu0 %v139, 2
  %v144 = vpop.permute.xlu0 %143
  %145 = vrot.lane.b32.xlu0 %v140, 2
  %v146 = vpop.permute.xlu0 %145
  %v149 = vadd.f32 %v129, %v144
  %v150 = vadd.f32 %v130, %v146
  %v151 = vtanh.pop %v149
  %v152 = vtanh.pop %v150
  %155 = vrot.lane.b32.xlu0 %v151, 4
  %v156 = vpop.permute.xlu0 %155
  %157 = vrot.lane.b32.xlu0 %v152, 4
  %v158 = vpop.permute.xlu0 %157
  %v161 = vmul.f32 %v124, %v156
  %v162 = vmul.f32 %v126, %v158
  %164 = vset.pattern.permute.xlu0 6
  %165 = vperm.xlu0 %164, %v161
  %v166 = vpop.permute.xlu0 %165
  %169 = vset.pattern.permute.xlu0 6
  %170 = vperm.xlu0 %169, %v162
  %v171 = vpop.permute.xlu0 %170
  %173 = vset.pattern.permute.xlu0 7
  %174 = vperm.xlu0 %173, %v161
  %v175 = vpop.permute.xlu0 %174
  %177 = vset.pattern.permute.xlu0 7
  %178 = vperm.xlu0 %177, %v162
  %v179 = vpop.permute.xlu0 %178
  %v181 = vmul.f32 %v166, %v104
  %v182 = vmul.f32 %v171, %v104
  %v185 = vrot.slane %v181, 7
  %v186 = vrot.slane %v182, 7
  %v189 = vadd.f32 %v99, %v185
  %v190 = vadd.f32 %v100, %v186
  %v191 = vmul.f32 %v175, %v108
  %v192 = vmul.f32 %v179, %v108
  %v195 = vrot.slane %v191, 7
  %v196 = vrot.slane %v192, 7
  %v199 = vadd.f32 %v189, %v195
  %v200 = vadd.f32 %v190, %v196
  %v201 = vxor.u32 %v199, 2147483648
  %v202 = vxor.u32 %v200, 2147483648
  %v203 = vmul.f32 %v201, 1.442695
  %v204 = vpow.pop %v203
  %v205 = vmul.f32 %v202, 1.442695
  %v206 = vpow.pop %v205
  %v207 = vadd.f32 %v204, 1.0
  %v208 = vadd.f32 %v206, 1.0
  %v209 = vrcp.pop %v207
  %v210 = vmul.f32 1.0, %v209
  %v211 = vrcp.pop %v208
  %v212 = vmul.f32 1.0, %v211
  %v213 = vtanh.pop %v199
  %v214 = vtanh.pop %v200
  %v217 = vrot.slane %v149, 7
  %v218 = vrot.slane %v150, 7
  %v221 = vmul.f32 %v210, %v217
  %v222 = vmul.f32 %v212, %v218
  %225 = vrot.lane.b32.xlu0 %v213, 124
  %v226 = vpop.permute.xlu0 %225
  %227 = vrot.lane.b32.xlu0 %v214, 124
  %v228 = vpop.permute.xlu0 %227
  %v231 = vmul.f32 %v210, %v226
  %v232 = vmul.f32 %v212, %v228
  %235 = vrot.lane.b32.xlu0 %v231, 2
  %v236 = vpop.permute.xlu0 %235
  %237 = vrot.lane.b32.xlu0 %v232, 2
  %v238 = vpop.permute.xlu0 %237
  %v241 = vadd.f32 %v221, %v236
  %v242 = vadd.f32 %v222, %v238
  %v243 = vtanh.pop %v241
  %v244 = vtanh.pop %v242
  %247 = vrot.lane.b32.xlu0 %v243, 4
  %v248 = vpop.permute.xlu0 %247
  %249 = vrot.lane.b32.xlu0 %v244, 4
  %v250 = vpop.permute.xlu0 %249
  %v253 = vmul.f32 %v210, %v248
  %v254 = vmul.f32 %v212, %v250
  %256 = vset.pattern.permute.xlu0 6
  %257 = vperm.xlu0 %256, %v253
  %v258 = vpop.permute.xlu0 %257
  %261 = vset.pattern.permute.xlu0 6
  %262 = vperm.xlu0 %261, %v254
  %v263 = vpop.permute.xlu0 %262
  %265 = vset.pattern.permute.xlu0 7
  %266 = vperm.xlu0 %265, %v253
  %v267 = vpop.permute.xlu0 %266
  %269 = vset.pattern.permute.xlu0 7
  %270 = vperm.xlu0 %269, %v254
  %v271 = vpop.permute.xlu0 %270
  %v273 = vmul.f32 %v258, %v104
  %v274 = vmul.f32 %v263, %v104
  %v277 = vrot.slane %v273, 7
  %v278 = vrot.slane %v274, 7
  %v281 = vadd.f32 %v99, %v277
  %v282 = vadd.f32 %v100, %v278
  %v283 = vmul.f32 %v267, %v108
  %v284 = vmul.f32 %v271, %v108
  %v287 = vrot.slane %v283, 7
  %v288 = vrot.slane %v284, 7
  %v291 = vadd.f32 %v281, %v287
  %v292 = vadd.f32 %v282, %v288
  %v293 = vxor.u32 %v291, 2147483648
  %v294 = vxor.u32 %v292, 2147483648
  %v295 = vmul.f32 %v293, 1.442695
  %v296 = vpow.pop %v295
  %v297 = vmul.f32 %v294, 1.442695
  %v298 = vpow.pop %v297
  %v299 = vadd.f32 %v296, 1.0
  %v300 = vadd.f32 %v298, 1.0
  %v301 = vrcp.pop %v299
  %v302 = vmul.f32 1.0, %v301
  %v303 = vrcp.pop %v300
  %v304 = vmul.f32 1.0, %v303
  %v305 = vtanh.pop %v291
  %v306 = vtanh.pop %v292
  %v309 = vrot.slane %v241, 7
  %v310 = vrot.slane %v242, 7
  %v313 = vmul.f32 %v302, %v309
  %v314 = vmul.f32 %v304, %v310
  %317 = vrot.lane.b32.xlu0 %v305, 124
  %v318 = vpop.permute.xlu0 %317
  %319 = vrot.lane.b32.xlu0 %v306, 124
  %v320 = vpop.permute.xlu0 %319
  %v323 = vmul.f32 %v302, %v318
  %v324 = vmul.f32 %v304, %v320
  %327 = vrot.lane.b32.xlu0 %v323, 2
  %v328 = vpop.permute.xlu0 %327
  %329 = vrot.lane.b32.xlu0 %v324, 2
  %v330 = vpop.permute.xlu0 %329
  %v333 = vadd.f32 %v313, %v328
  %v334 = vadd.f32 %v314, %v330
  %v335 = vtanh.pop %v333
  %v336 = vtanh.pop %v334
  %339 = vrot.lane.b32.xlu0 %v335, 4
  %v340 = vpop.permute.xlu0 %339
  %341 = vrot.lane.b32.xlu0 %v336, 4
  %v342 = vpop.permute.xlu0 %341
  %v345 = vmul.f32 %v302, %v340
  %v346 = vmul.f32 %v304, %v342
  %348 = vset.pattern.permute.xlu0 6
  %349 = vperm.xlu0 %348, %v345
  %v350 = vpop.permute.xlu0 %349
  %353 = vset.pattern.permute.xlu0 6
  %354 = vperm.xlu0 %353, %v346
  %v355 = vpop.permute.xlu0 %354
  %357 = vset.pattern.permute.xlu0 7
  %358 = vperm.xlu0 %357, %v345
  %v359 = vpop.permute.xlu0 %358
  %361 = vset.pattern.permute.xlu0 7
  %362 = vperm.xlu0 %361, %v346
  %v363 = vpop.permute.xlu0 %362
  %v365 = vmul.f32 %v350, %v104
  %v366 = vmul.f32 %v355, %v104
  %v369 = vrot.slane %v365, 7
  %v370 = vrot.slane %v366, 7
  %v373 = vadd.f32 %v99, %v369
  %v374 = vadd.f32 %v100, %v370
  %v375 = vmul.f32 %v359, %v108
  %v376 = vmul.f32 %v363, %v108
  %v379 = vrot.slane %v375, 7
  %v380 = vrot.slane %v376, 7
  %v383 = vadd.f32 %v373, %v379
  %v384 = vadd.f32 %v374, %v380
  %v385 = vxor.u32 %v383, 2147483648
  %v386 = vxor.u32 %v384, 2147483648
  %v387 = vmul.f32 %v385, 1.442695
  %v388 = vpow.pop %v387
  %v389 = vmul.f32 %v386, 1.442695
  %v390 = vpow.pop %v389
  %v391 = vadd.f32 %v388, 1.0
  %v392 = vadd.f32 %v390, 1.0
  %v393 = vrcp.pop %v391
  %v394 = vmul.f32 1.0, %v393
  %v395 = vrcp.pop %v392
  %v396 = vmul.f32 1.0, %v395
  %v397 = vtanh.pop %v383
  %v398 = vtanh.pop %v384
  %v401 = vrot.slane %v333, 7
  %v402 = vrot.slane %v334, 7
  %v405 = vmul.f32 %v394, %v401
  %v406 = vmul.f32 %v396, %v402
  %409 = vrot.lane.b32.xlu0 %v397, 124
  %v410 = vpop.permute.xlu0 %409
  %411 = vrot.lane.b32.xlu0 %v398, 124
  %v412 = vpop.permute.xlu0 %411
  %v415 = vmul.f32 %v394, %v410
  %v416 = vmul.f32 %v396, %v412
  %419 = vrot.lane.b32.xlu0 %v415, 2
  %v420 = vpop.permute.xlu0 %419
  %421 = vrot.lane.b32.xlu0 %v416, 2
  %v422 = vpop.permute.xlu0 %421
  %v425 = vadd.f32 %v405, %v420
  %v426 = vadd.f32 %v406, %v422
  %v427 = vtanh.pop %v425
  %v428 = vtanh.pop %v426
  %431 = vrot.lane.b32.xlu0 %v427, 4
  %v432 = vpop.permute.xlu0 %431
  %433 = vrot.lane.b32.xlu0 %v428, 4
  %v434 = vpop.permute.xlu0 %433
  %v437 = vmul.f32 %v394, %v432
  %v438 = vmul.f32 %v396, %v434
  %440 = vset.pattern.permute.xlu0 6
  %441 = vperm.xlu0 %440, %v437
  %v442 = vpop.permute.xlu0 %441
  %445 = vset.pattern.permute.xlu0 6
  %446 = vperm.xlu0 %445, %v438
  %v447 = vpop.permute.xlu0 %446
  %449 = vset.pattern.permute.xlu0 7
  %450 = vperm.xlu0 %449, %v437
  %v451 = vpop.permute.xlu0 %450
  %453 = vset.pattern.permute.xlu0 7
  %454 = vperm.xlu0 %453, %v438
  %v455 = vpop.permute.xlu0 %454
  %v457 = vmul.f32 %v442, %v104
  %v458 = vmul.f32 %v447, %v104
  %v461 = vrot.slane %v457, 7
  %v462 = vrot.slane %v458, 7
  %v465 = vadd.f32 %v99, %v461
  %v466 = vadd.f32 %v100, %v462
  %v467 = vmul.f32 %v451, %v108
  %v468 = vmul.f32 %v455, %v108
  %v471 = vrot.slane %v467, 7
  %v472 = vrot.slane %v468, 7
  %v475 = vadd.f32 %v465, %v471
  %v476 = vadd.f32 %v466, %v472
  %v477 = vxor.u32 %v475, 2147483648
  %v478 = vxor.u32 %v476, 2147483648
  %v479 = vmul.f32 %v477, 1.442695
  %v480 = vpow.pop %v479
  %v481 = vmul.f32 %v478, 1.442695
  %v482 = vpow.pop %v481
  %v483 = vadd.f32 %v480, 1.0
  %v484 = vadd.f32 %v482, 1.0
  %v485 = vrcp.pop %v483
  %v486 = vmul.f32 1.0, %v485
  %v487 = vrcp.pop %v484
  %v488 = vmul.f32 1.0, %v487
  %v489 = vtanh.pop %v475
  %v490 = vtanh.pop %v476
  %v493 = vrot.slane %v425, 7
  %v494 = vrot.slane %v426, 7
  %v497 = vmul.f32 %v486, %v493
  %v498 = vmul.f32 %v488, %v494
  %501 = vrot.lane.b32.xlu0 %v489, 124
  %v502 = vpop.permute.xlu0 %501
  %503 = vrot.lane.b32.xlu0 %v490, 124
  %v504 = vpop.permute.xlu0 %503
  %v507 = vmul.f32 %v486, %v502
  %v508 = vmul.f32 %v488, %v504
  %511 = vrot.lane.b32.xlu0 %v507, 2
  %v512 = vpop.permute.xlu0 %511
  %513 = vrot.lane.b32.xlu0 %v508, 2
  %v514 = vpop.permute.xlu0 %513
  %v517 = vadd.f32 %v497, %v512
  %v518 = vadd.f32 %v498, %v514
  %v519 = vtanh.pop %v517
  %v520 = vtanh.pop %v518
  %523 = vrot.lane.b32.xlu0 %v519, 4
  %v524 = vpop.permute.xlu0 %523
  %525 = vrot.lane.b32.xlu0 %v520, 4
  %v526 = vpop.permute.xlu0 %525
  %v529 = vmul.f32 %v486, %v524
  %v530 = vmul.f32 %v488, %v526
  %532 = vset.pattern.permute.xlu0 6
  %533 = vperm.xlu0 %532, %v529
  %v534 = vpop.permute.xlu0 %533
  %537 = vset.pattern.permute.xlu0 6
  %538 = vperm.xlu0 %537, %v530
  %v539 = vpop.permute.xlu0 %538
  %541 = vset.pattern.permute.xlu0 7
  %542 = vperm.xlu0 %541, %v529
  %v543 = vpop.permute.xlu0 %542
  %545 = vset.pattern.permute.xlu0 7
  %546 = vperm.xlu0 %545, %v530
  %v547 = vpop.permute.xlu0 %546
  %v549 = vmul.f32 %v534, %v104
  %v550 = vmul.f32 %v539, %v104
  %v553 = vrot.slane %v549, 7
  %v554 = vrot.slane %v550, 7
  %v557 = vadd.f32 %v99, %v553
  %v558 = vadd.f32 %v100, %v554
  %v559 = vmul.f32 %v543, %v108
  %v560 = vmul.f32 %v547, %v108
  %v563 = vrot.slane %v559, 7
  %v564 = vrot.slane %v560, 7
  %v567 = vadd.f32 %v557, %v563
  %v568 = vadd.f32 %v558, %v564
  %v569 = vxor.u32 %v567, 2147483648
  %v570 = vxor.u32 %v568, 2147483648
  %v571 = vmul.f32 %v569, 1.442695
  %v572 = vpow.pop %v571
  %v573 = vmul.f32 %v570, 1.442695
  %v574 = vpow.pop %v573
  %v575 = vadd.f32 %v572, 1.0
  %v576 = vadd.f32 %v574, 1.0
  %v577 = vrcp.pop %v575
  %v578 = vmul.f32 1.0, %v577
  %v579 = vrcp.pop %v576
  %v580 = vmul.f32 1.0, %v579
  %v581 = vtanh.pop %v567
  %v582 = vtanh.pop %v568
  %v585 = vrot.slane %v517, 7
  %v586 = vrot.slane %v518, 7
  %v589 = vmul.f32 %v578, %v585
  %v590 = vmul.f32 %v580, %v586
  %593 = vrot.lane.b32.xlu0 %v581, 124
  %v594 = vpop.permute.xlu0 %593
  %595 = vrot.lane.b32.xlu0 %v582, 124
  %v596 = vpop.permute.xlu0 %595
  %v599 = vmul.f32 %v578, %v594
  %v600 = vmul.f32 %v580, %v596
  %603 = vrot.lane.b32.xlu0 %v599, 2
  %v604 = vpop.permute.xlu0 %603
  %605 = vrot.lane.b32.xlu0 %v600, 2
  %v606 = vpop.permute.xlu0 %605
  %v609 = vadd.f32 %v589, %v604
  %v610 = vadd.f32 %v590, %v606
  %v611 = vtanh.pop %v609
  %v612 = vtanh.pop %v610
  %615 = vrot.lane.b32.xlu0 %v611, 4
  %v616 = vpop.permute.xlu0 %615
  %617 = vrot.lane.b32.xlu0 %v612, 4
  %v618 = vpop.permute.xlu0 %617
  %v621 = vmul.f32 %v578, %v616
  %v622 = vmul.f32 %v580, %v618
  %624 = vset.pattern.permute.xlu0 6
  %625 = vperm.xlu0 %624, %v621
  %v626 = vpop.permute.xlu0 %625
  %629 = vset.pattern.permute.xlu0 6
  %630 = vperm.xlu0 %629, %v622
  %v631 = vpop.permute.xlu0 %630
  %633 = vset.pattern.permute.xlu0 7
  %634 = vperm.xlu0 %633, %v621
  %v635 = vpop.permute.xlu0 %634
  %637 = vset.pattern.permute.xlu0 7
  %638 = vperm.xlu0 %637, %v622
  %v639 = vpop.permute.xlu0 %638
  %v641 = vmul.f32 %v626, %v104
  %v642 = vmul.f32 %v631, %v104
  %v645 = vrot.slane %v641, 7
  %v646 = vrot.slane %v642, 7
  %v649 = vadd.f32 %v99, %v645
  %v650 = vadd.f32 %v100, %v646
  %v651 = vmul.f32 %v635, %v108
  %v652 = vmul.f32 %v639, %v108
  %v655 = vrot.slane %v651, 7
  %v656 = vrot.slane %v652, 7
  %v659 = vadd.f32 %v649, %v655
  %v660 = vadd.f32 %v650, %v656
  %v661 = vxor.u32 %v659, 2147483648
  %v662 = vxor.u32 %v660, 2147483648
  %v663 = vmul.f32 %v661, 1.442695
  %v664 = vpow.pop %v663
  %v665 = vmul.f32 %v662, 1.442695
  %v666 = vpow.pop %v665
  %v667 = vadd.f32 %v664, 1.0
  %v668 = vadd.f32 %v666, 1.0
  %v669 = vrcp.pop %v667
  %v670 = vmul.f32 1.0, %v669
  %v671 = vrcp.pop %v668
  %v672 = vmul.f32 1.0, %v671
  %v673 = vtanh.pop %v659
  %v674 = vtanh.pop %v660
  %v677 = vrot.slane %v609, 7
  %v678 = vrot.slane %v610, 7
  %v681 = vmul.f32 %v670, %v677
  %v682 = vmul.f32 %v672, %v678
  %685 = vrot.lane.b32.xlu0 %v673, 124
  %v686 = vpop.permute.xlu0 %685
  %687 = vrot.lane.b32.xlu0 %v674, 124
  %v688 = vpop.permute.xlu0 %687
  %v691 = vmul.f32 %v670, %v686
  %v692 = vmul.f32 %v672, %v688
  %695 = vrot.lane.b32.xlu0 %v691, 2
  %v696 = vpop.permute.xlu0 %695
  %697 = vrot.lane.b32.xlu0 %v692, 2
  %v698 = vpop.permute.xlu0 %697
  %v701 = vadd.f32 %v681, %v696
  %v702 = vadd.f32 %v682, %v698
  %v703 = vtanh.pop %v701
  %v704 = vtanh.pop %v702
  %707 = vrot.lane.b32.xlu0 %v703, 4
  %v708 = vpop.permute.xlu0 %707
  %709 = vrot.lane.b32.xlu0 %v704, 4
  %v710 = vpop.permute.xlu0 %709
  %v713 = vmul.f32 %v670, %v708
  %v714 = vmul.f32 %v672, %v710
  %716 = vset.pattern.permute.xlu0 6
  %717 = vperm.xlu0 %716, %v713
  %v718 = vpop.permute.xlu0 %717
  %721 = vset.pattern.permute.xlu0 6
  %722 = vperm.xlu0 %721, %v714
  %v723 = vpop.permute.xlu0 %722
  %725 = vset.pattern.permute.xlu0 7
  %726 = vperm.xlu0 %725, %v713
  %v727 = vpop.permute.xlu0 %726
  %729 = vset.pattern.permute.xlu0 7
  %730 = vperm.xlu0 %729, %v714
  %v731 = vpop.permute.xlu0 %730
  %v733 = vmul.f32 %v718, %v104
  %v734 = vmul.f32 %v723, %v104
  %v737 = vrot.slane %v733, 7
  %v738 = vrot.slane %v734, 7
  %v741 = vadd.f32 %v99, %v737
  %v742 = vadd.f32 %v100, %v738
  %v743 = vmul.f32 %v727, %v108
  %v744 = vmul.f32 %v731, %v108
  %v747 = vrot.slane %v743, 7
  %v748 = vrot.slane %v744, 7
  %v751 = vadd.f32 %v741, %v747
  %v752 = vadd.f32 %v742, %v748
  %v753 = vxor.u32 %v751, 2147483648
  %v754 = vxor.u32 %v752, 2147483648
  %v755 = vmul.f32 %v753, 1.442695
  %v756 = vpow.pop %v755
  %v757 = vmul.f32 %v754, 1.442695
  %v758 = vpow.pop %v757
  %v759 = vadd.f32 %v756, 1.0
  %v760 = vadd.f32 %v758, 1.0
  %v761 = vrcp.pop %v759
  %v762 = vmul.f32 1.0, %v761
  %v763 = vrcp.pop %v760
  %v764 = vmul.f32 1.0, %v763
  %v765 = vtanh.pop %v751
  %v766 = vtanh.pop %v752
  %v769 = vrot.slane %v701, 7
  %v770 = vrot.slane %v702, 7
  %v773 = vmul.f32 %v762, %v769
  %v774 = vmul.f32 %v764, %v770
  %777 = vrot.lane.b32.xlu0 %v765, 124
  %v778 = vpop.permute.xlu0 %777
  %779 = vrot.lane.b32.xlu0 %v766, 124
  %v780 = vpop.permute.xlu0 %779
  %v783 = vmul.f32 %v762, %v778
  %v784 = vmul.f32 %v764, %v780
  %787 = vrot.lane.b32.xlu0 %v783, 2
  %v788 = vpop.permute.xlu0 %787
  %789 = vrot.lane.b32.xlu0 %v784, 2
  %v790 = vpop.permute.xlu0 %789
  %v793 = vadd.f32 %v773, %v788
  %v794 = vadd.f32 %v774, %v790
  %v795 = vtanh.pop %v793
  %v796 = vtanh.pop %v794
  %799 = vrot.lane.b32.xlu0 %v795, 4
  %v800 = vpop.permute.xlu0 %799
  %801 = vrot.lane.b32.xlu0 %v796, 4
  %v802 = vpop.permute.xlu0 %801
  %v805 = vmul.f32 %v762, %v800
  %v806 = vmul.f32 %v764, %v802
  %v807 = vmax.f32 %v805, 0.0
  %v808 = vmax.f32 %v806, 0.0
  %v809 = vlaneseq
  %v810 = vshrl.u32 %v809, 7
  %v811 = vsub.s32 0, %v810
  %v812 = vrot.slane %v12, %v811
  %v813 = vlaneseq
  %v814 = vshrl.u32 %v813, 7
  %v815 = vsub.s32 1, %v814
  %v816 = vrot.slane %v12, %v815
  %v817 = vlaneseq
  %v818 = vshrl.u32 %v817, 7
  %v819 = vsub.s32 2, %v818
  %v820 = vrot.slane %v12, %v819
  %822 = vset.pattern.permute.xlu0 6
  %823 = vperm.xlu0 %822, %v807
  %v824 = vpop.permute.xlu0 %823
  %827 = vset.pattern.permute.xlu0 6
  %828 = vperm.xlu0 %827, %v808
  %v829 = vpop.permute.xlu0 %828
  %v831 = vmul.f32 %v824, %v812
  %v832 = vmul.f32 %v829, %v812
  %833 = vset.pattern.permute.xlu0 7
  %834 = vperm.xlu0 %833, %v807
  %v835 = vpop.permute.xlu0 %834
  %837 = vset.pattern.permute.xlu0 7
  %838 = vperm.xlu0 %837, %v808
  %v839 = vpop.permute.xlu0 %838
  %v841 = vmul.f32 %v835, %v816
  %v842 = vmul.f32 %v839, %v816
  %v843 = vadd.f32 %v831, %v841
  %v844 = vadd.f32 %v832, %v842
  %v845 = vadd.f32 %v843, %v820
  %v846 = vadd.f32 %v844, %v820
  %v847 = vmax.f32 %v845, 0.0
  %v848 = vmax.f32 %v846, 0.0
  %v849 = vlaneseq
  %v850 = vshrl.u32 %v849, 7
  %v851 = vsub.s32 3, %v850
  %v852 = vrot.slane %v12, %v851
  %v853 = vmul.f32 %v847, %v852
  %v854 = vmul.f32 %v848, %v852
  %v857 = vrot.slane %v854, 7
  %vm860 = vcmask 1047559
  %v861 = vsel %vm860, %v853, 0.0
  %862 = vadd.xlane.f32.xlu0 %v861
  %v863 = vpop.xlane.xlu0 %862
  %vm864 = vcmask 1040384
  %v865 = vsel %vm864, %v857, 0.0
  %866 = vadd.xlane.f32.xlu0 %v865
  %v867 = vpop.xlane.xlu0 %866
  %v868 = vlaneseq
  %v869 = vshrl.u32 %v868, 7
  %v870 = vsub.s32 4, %v869
  %v871 = vrot.slane %v12, %v870
  %v872 = vadd.f32 %v863, %v871
  %v873 = vadd.f32 %v867, %v871
  %875 = vset.pattern.permute.xlu0 0
  %876 = vperm.xlu0 %875, %v872
  %v877 = vpop.permute.xlu0 %876
  %880 = vset.pattern.permute.xlu0 0
  %881 = vperm.xlu0 %880, %v873
  %v882 = vpop.permute.xlu0 %881
  %884 = vst [vmem:[%s2 - $0x7] sm:$0x80] %v877
  %885 = vst [vmem:[%s2 + $0x1] sm:$0x1] %v882
  // Predicated region
  $region10: #{lstm1_forward.1} parent=0 // pred_check
    _
  $region11: #{lstm1_forward.1} parent=0 // pred_check_branch
    %887 = sbr.rel (0) target = $region13
  $region12: #{lstm1_forward.1} parent=0 // pred_region
    _
  $region13: #{lstm1_forward.1} parent=0 // pred_fallthru
    _
  // Predicated region
  $region14: #{lstm1_forward.1} parent=0 // pred_check
    _
  $region15: #{lstm1_forward.1} parent=0 // pred_check_branch
    %889 = sbr.rel (0) target = $region17
  $region16: #{lstm1_forward.1} parent=0 // pred_region
    _
  $region17: #{lstm1_forward.1} parent=0 // pred_fallthru
    _

</llo_original>
